<compile_context>
chip_gen: v7x
topology: tpu7x:2x2x1
jax: 0.10.0
libtpu: 0.0.40
codegen_flags: <defaults>
</compile_context>

<pallas_src>
import functools
import math

import jax
import jax.numpy as jnp
from jax.experimental import pallas as pl
from jax.experimental.pallas import tpu as pltpu

_LANE = 128
_SUBLANE = 8
# 32 covers the minimum sublane tile of every dtype we may see (f32: 8,
# bf16/f16: 16, int8/fp8: 32), so a 32-multiple row-block is always legal.
_ROW_ALIGN = 32
# ~4 MiB of native-dtype data per input per pipeline buffer: long enough to
# amortize the ~0.35 us per-grid-step overhead even at v7x HBM speeds, and
# 2 inputs x 2 buffers = 16 MiB fits the 32 MiB scoped VMEM limit everywhere.
_TILE_BYTES = 4 * 1024 * 1024
_VMEM_LIMIT_BYTES = 32 * 1024 * 1024
_MAX_NATURAL_WIDTH = 32 * 1024


def _round_up(x, m):
    return ((x + m - 1) // m) * m


def _mse_partial_kernel(pr_ref, gt_ref, out_ref, acc_ref, *,
                        steps_per_core, full_steps, rem):
    """Per-core partial sum of (pr - gt)**2 over this core's tile range."""
    c = pl.program_id(0)                 # core (parallel) axis
    j = pl.program_id(1)                 # tile (arbitrary / reduction) axis
    gs = c * steps_per_core + j          # global tile index (may round up past
                                         # the data; such steps are skipped)

    @pl.when(j == 0)
    def _init():
        acc_ref[...] = jnp.zeros_like(acc_ref)

    def _tile_sq(masked):
        pr = pr_ref[...].astype(jnp.float32)
        gt = gt_ref[...].astype(jnp.float32)
        d = pr - gt
        rows, cols = d.shape
        if masked:
            # Tile-local flat index (< rows*cols < 2**31 -> int32 safe).
            rid = jax.lax.broadcasted_iota(jnp.int32, (rows, cols), 0)
            cid = jax.lax.broadcasted_iota(jnp.int32, (rows, cols), 1)
            local = rid * cols + cid
            d = jnp.where(local < rem, d, 0.0)   # mask before squaring (NaN-safe)
        d = d.reshape(rows // _SUBLANE, _SUBLANE, cols)
        return jnp.sum(d * d, axis=0)            # pure VPU adds -> (8, cols)

    @pl.when(gs < full_steps)
    def _full_tile():
        acc_ref[...] += _tile_sq(False)          # interior tiles: no mask work

    if rem > 0:
        @pl.when(gs == full_steps)
        def _boundary_tile():
            acc_ref[...] += _tile_sq(True)       # only the boundary tile masks

    # gs > full_steps: duplicated (clamped) round-up steps contribute nothing.

    @pl.when(j == steps_per_core - 1)
    def _finalize():
        # Single cross-lane/sublane reduce per core; scalar to SMEM output.
        out_ref[0, 0] = jnp.sum(acc_ref[...])


def _as_2d_slab(x):
    """Collapse x to a 2-D (rows, width) slab with minimal data movement."""
    n = x.size
    if (x.ndim >= 2 and x.shape[-1] % _LANE == 0
            and x.shape[-1] <= _MAX_NATURAL_WIDTH):
        # Natural collapse of leading dims: lane-friendly last dim is kept, so
        # no HBM relayout copy and no padding are needed.
        width = x.shape[-1]
        return x.reshape(n // width, width), width
    # Fallback: dense 128-lane slab.  Only the sub-128 remainder is padded; the
    # ragged tail is masked in-kernel.
    pad = (-n) % _LANE
    flat = x.reshape(-1)
    if pad:
        flat = jnp.pad(flat, (0, pad))
    return flat.reshape((n + pad) // _LANE, _LANE), _LANE


def quadratic_loss(y_pr, y_gt, *, tile_bytes=_TILE_BYTES):
    """Pallas TPU forward of QuadraticLoss == mean((y_pr - y_gt) ** 2).

    NOTE: the reference module applies self.activation(y_pr) but then passes
    the raw y_pr to MSELoss, so the activation never affects the output; it is
    omitted here on purpose.
    """
    assert y_pr.shape == y_gt.shape, (y_pr.shape, y_gt.shape)
    n = int(math.prod(y_pr.shape)) if y_pr.ndim else 1
    assert n > 0

    pr2d, width = _as_2d_slab(y_pr)
    gt2d, _ = _as_2d_slab(y_gt)
    rows_total = pr2d.shape[0]

    # Rows per tile: ~tile_bytes of native-dtype data per input (bf16 gets 2x
    # the rows of f32 for the same DMA length), rounded to a 32-row multiple.
    itemsize = jnp.dtype(pr2d.dtype).itemsize
    tile_elems = max(tile_bytes // itemsize, _ROW_ALIGN * width)
    block_rows = max((tile_elems // width) // _ROW_ALIGN * _ROW_ALIGN, _ROW_ALIGN)
    block_rows = min(block_rows, _round_up(rows_total, _ROW_ALIGN))

    steps = (rows_total + block_rows - 1) // block_rows
    # Dual-TC split (v7x): only when the round-up waste is zero or negligible;
    # single-TC parts just run the parallel axis as a serial loop.
    num_cores = 2 if (steps >= 2 and (steps % 2 == 0 or steps >= 8)) else 1
    steps_per_core = (steps + num_cores - 1) // num_cores

    block_elems = block_rows * width
    full_steps = n // block_elems            # tiles that are entirely valid
    rem = n - full_steps * block_elems       # valid elems in the boundary tile
    last_block = steps - 1                   # clamp target for round-up steps

    kernel = functools.partial(
        _mse_partial_kernel,
        steps_per_core=int(steps_per_core),
        full_steps=int(full_steps),
        rem=int(rem),
    )

    def in_index(c, j):
        # Clamp so round-up steps never issue an out-of-bounds block DMA; the
        # kernel skips their compute via the gs > full_steps guard.
        return (jnp.minimum(c * steps_per_core + j, last_block), 0)

    partials = pl.pallas_call(
        kernel,
        out_shape=jax.ShapeDtypeStruct((num_cores, 1), jnp.float32),
        grid_spec=pltpu.PrefetchScalarGridSpec(
            num_scalar_prefetch=0,
            grid=(num_cores, int(steps_per_core)),
            in_specs=[
                pl.BlockSpec((block_rows, width), in_index),
                pl.BlockSpec((block_rows, width), in_index),
            ],
            out_specs=pl.BlockSpec((1, 1), lambda c, j: (c, 0),
                                   memory_space=pltpu.MemorySpace.SMEM),
            scratch_shapes=[pltpu.VMEM((_SUBLANE, width), jnp.float32)],
        ),
        compiler_params=pltpu.CompilerParams(
            dimension_semantics=("parallel", "arbitrary"),
            vmem_limit_bytes=_VMEM_LIMIT_BYTES,
        ),
    )(pr2d, gt2d)

    # Add the (at most 2) per-core partials and apply the mean normalization.
    return jnp.sum(partials) * jnp.float32(1.0 / n)


def _reference(y_pr, y_gt):
    d = y_pr.astype(jnp.float32) - y_gt.astype(jnp.float32)
    return jnp.mean(d * d)


if __name__ == "__main__":
    key = jax.random.PRNGKey(0)
    ks = jax.random.split(key, 8)

    # Main case: NCHW prediction/target, batch=2, channels=4, 16x16 spatial.
    y_pr = jax.random.normal(ks[0], (2, 4, 16, 16), dtype=jnp.float32)
    y_gt = jax.random.normal(ks[1], (2, 4, 16, 16), dtype=jnp.float32)
    loss = jax.block_until_ready(quadratic_loss(y_pr, y_gt))
    ref = _reference(y_pr, y_gt)
    assert jnp.allclose(loss, ref, rtol=1e-5, atol=1e-6), (loss, ref)

    # Ragged size (3264 elems) exercises the 128-lane slab + in-kernel tail mask.
    a = jax.random.normal(ks[2], (3, 4, 16, 17), dtype=jnp.float32)
    b = jax.random.normal(ks[3], (3, 4, 16, 17), dtype=jnp.float32)
    loss2 = jax.block_until_ready(quadratic_loss(a, b))
    assert jnp.allclose(loss2, _reference(a, b), rtol=1e-5, atol=1e-6), loss2

    # Lane-friendly last dim -> natural (copy-free) collapse; small tile_bytes
    # forces a multi-step grid with the 2-way per-core partial sums (rem == 0).
    c_ = jax.random.normal(ks[4], (2, 4, 64, 128), dtype=jnp.float32)
    d_ = jax.random.normal(ks[5], (2, 4, 64, 128), dtype=jnp.float32)
    loss3 = jax.block_until_ready(quadratic_loss(c_, d_, tile_bytes=32 * 1024))
    assert jnp.allclose(loss3, _reference(c_, d_), rtol=1e-5, atol=1e-6), loss3

    # Odd step count exercises the clamped round-up step + boundary-tile mask.
    e_ = jax.random.normal(ks[6], (2, 4, 66, 128), dtype=jnp.float32)
    f_ = jax.random.normal(ks[7], (2, 4, 66, 128), dtype=jnp.float32)
    loss4 = jax.block_until_ready(quadratic_loss(e_, f_, tile_bytes=32 * 1024))
    assert jnp.allclose(loss4, _reference(e_, f_), rtol=1e-5, atol=1e-6), loss4

    print("KERNEL_OK")
</pallas_src>

<mosaic_0001>
module attributes {stable_mosaic.version = 11 : i64} {
  func.func @_mse_partial_kernel(%arg0: i32, %arg1: i32, %arg2: memref<32x128xf32, #tpu.memory_space<vmem>>, %arg3: memref<32x128xf32, #tpu.memory_space<vmem>>, %arg4: memref<1x1xf32, #tpu.memory_space<smem>>, %arg5: memref<8x128xf32, #tpu.memory_space<vmem>>) attributes {dimension_semantics = [#tpu.dimension_semantics<parallel>, #tpu.dimension_semantics<arbitrary>], iteration_bounds = array<i64: 1, 1>, scalar_prefetch = 0 : i64, scratch_operands = 1 : i64, tpu.core_type = #tpu.core_type<tc>, window_params = [{transform_indices = @transform_0, window_bounds = array<i64: 32, 128>}, {transform_indices = @transform_1, window_bounds = array<i64: 32, 128>}, {transform_indices = @transform_2, window_bounds = array<i64: 1, 1>}]} {
    %c1_i32 = arith.constant 1 : i32
    %0 = arith.muli %arg0, %c1_i32 : i32
    %1 = arith.addi %0, %arg1 : i32
    %c0_i32 = arith.constant 0 : i32
    %2 = arith.cmpi eq, %arg1, %c0_i32 : i32
    %3 = arith.extui %2 : i1 to i32
    %c0_i32_0 = arith.constant 0 : i32
    %4 = arith.cmpi ne, %3, %c0_i32_0 : i32
    scf.if %4 {
      %cst = arith.constant 0.000000e+00 : f32
      %14 = vector.broadcast %cst : f32 to vector<8x128xf32>
      %c0 = arith.constant 0 : index
      %c0_7 = arith.constant 0 : index
      %15 = vector.load %arg5[%c0, %c0_7] : memref<8x128xf32, #tpu.memory_space<vmem>>, vector<8x128xf32>
      tpu.vector_store %arg5[%c0, %c0_7], %14 {strides = array<i32>} : memref<8x128xf32, #tpu.memory_space<vmem>>, vector<8x128xf32>,
    } else {
    }
    %c0_i32_1 = arith.constant 0 : i32
    %5 = arith.cmpi slt, %1, %c0_i32_1 : i32
    %6 = arith.extui %5 : i1 to i32
    %c0_i32_2 = arith.constant 0 : i32
    %7 = arith.cmpi ne, %6, %c0_i32_2 : i32
    scf.if %7 {
      %c0 = arith.constant 0 : index
      %c0_7 = arith.constant 0 : index
      %14 = vector.load %arg5[%c0, %c0_7] : memref<8x128xf32, #tpu.memory_space<vmem>>, vector<8x128xf32>
      %c0_8 = arith.constant 0 : index
      %c0_9 = arith.constant 0 : index
      %15 = vector.load %arg2[%c0_8, %c0_9] : memref<32x128xf32, #tpu.memory_space<vmem>>, vector<32x128xf32>
      %c0_10 = arith.constant 0 : index
      %c0_11 = arith.constant 0 : index
      %16 = vector.load %arg3[%c0_10, %c0_11] : memref<32x128xf32, #tpu.memory_space<vmem>>, vector<32x128xf32>
      %17 = arith.subf %15, %16 : vector<32x128xf32>
      %18 = vector.shape_cast %17 : vector<32x128xf32> to vector<4x8x128xf32>
      %19 = arith.mulf %18, %18 : vector<4x8x128xf32>
      %cst = arith.constant dense<0.000000e+00> : vector<8x128xf32>
      %20 = vector.multi_reduction <add>, %19, %cst [0] : vector<4x8x128xf32> to vector<8x128xf32>
      %21 = arith.addf %14, %20 : vector<8x128xf32>
      %c0_12 = arith.constant 0 : index
      %c0_13 = arith.constant 0 : index
      %22 = vector.load %arg5[%c0_12, %c0_13] : memref<8x128xf32, #tpu.memory_space<vmem>>, vector<8x128xf32>
      tpu.vector_store %arg5[%c0_12, %c0_13], %21 {strides = array<i32>} : memref<8x128xf32, #tpu.memory_space<vmem>>, vector<8x128xf32>,
    } else {
    }
    %c0_i32_3 = arith.constant 0 : i32
    %8 = arith.cmpi eq, %1, %c0_i32_3 : i32
    %9 = arith.extui %8 : i1 to i32
    %c0_i32_4 = arith.constant 0 : i32
    %10 = arith.cmpi ne, %9, %c0_i32_4 : i32
    scf.if %10 {
      %c0 = arith.constant 0 : index
      %c0_7 = arith.constant 0 : index
      %14 = vector.load %arg5[%c0, %c0_7] : memref<8x128xf32, #tpu.memory_space<vmem>>, vector<8x128xf32>
      %c0_8 = arith.constant 0 : index
      %c0_9 = arith.constant 0 : index
      %15 = vector.load %arg2[%c0_8, %c0_9] : memref<32x128xf32, #tpu.memory_space<vmem>>, vector<32x128xf32>
      %c0_10 = arith.constant 0 : index
      %c0_11 = arith.constant 0 : index
      %16 = vector.load %arg3[%c0_10, %c0_11] : memref<32x128xf32, #tpu.memory_space<vmem>>, vector<32x128xf32>
      %17 = arith.subf %15, %16 : vector<32x128xf32>
      %18 = tpu.iota {dimensions = array<i32: 0>} : vector<32x128xi32>
      %19 = tpu.iota {dimensions = array<i32: 1>} : vector<32x128xi32>
      %c128_i32 = arith.constant 128 : i32
      %20 = vector.broadcast %c128_i32 : i32 to vector<32x128xi32>
      %21 = arith.muli %18, %20 : vector<32x128xi32>
      %22 = arith.addi %21, %19 : vector<32x128xi32>
      %c2048_i32 = arith.constant 2048 : i32
      %23 = vector.broadcast %c2048_i32 : i32 to vector<32x128xi32>
      %24 = arith.cmpi slt, %22, %23 : vector<32x128xi32>
      %cst = arith.constant 0.000000e+00 : f32
      %25 = vector.broadcast %cst : f32 to vector<32x128xf32>
      %26 = arith.select %24, %17, %25 : vector<32x128xi1>, vector<32x128xf32>
      %27 = vector.shape_cast %26 : vector<32x128xf32> to vector<4x8x128xf32>
      %28 = arith.mulf %27, %27 : vector<4x8x128xf32>
      %cst_12 = arith.constant dense<0.000000e+00> : vector<8x128xf32>
      %29 = vector.multi_reduction <add>, %28, %cst_12 [0] : vector<4x8x128xf32> to vector<8x128xf32>
      %30 = arith.addf %14, %29 : vector<8x128xf32>
      %c0_13 = arith.constant 0 : index
      %c0_14 = arith.constant 0 : index
      %31 = vector.load %arg5[%c0_13, %c0_14] : memref<8x128xf32, #tpu.memory_space<vmem>>, vector<8x128xf32>
      tpu.vector_store %arg5[%c0_13, %c0_14], %30 {strides = array<i32>} : memref<8x128xf32, #tpu.memory_space<vmem>>, vector<8x128xf32>,
    } else {
    }
    %c0_i32_5 = arith.constant 0 : i32
    %11 = arith.cmpi eq, %arg1, %c0_i32_5 : i32
    %12 = arith.extui %11 : i1 to i32
    %c0_i32_6 = arith.constant 0 : i32
    %13 = arith.cmpi ne, %12, %c0_i32_6 : i32
    scf.if %13 {
      %c0 = arith.constant 0 : index
      %c0_7 = arith.constant 0 : index
      %14 = vector.load %arg5[%c0, %c0_7] : memref<8x128xf32, #tpu.memory_space<vmem>>, vector<8x128xf32>
      %15 = vector.shape_cast %14 : vector<8x128xf32> to vector<1x8x128xf32>
      %cst = arith.constant dense<0.000000e+00> : vector<1xf32>
      %16 = vector.multi_reduction <add>, %15, %cst [1, 2] : vector<1x8x128xf32> to vector<1xf32>
      %17 = vector.shape_cast %16 : vector<1xf32> to vector<1x1x1xf32>
      %18 = vector.extract %17[0, 0, 0] : f32 from vector<1x1x1xf32>
      %c0_8 = arith.constant 0 : index
      %c0_9 = arith.constant 0 : index
      %19 = memref.load %arg4[%c0_8, %c0_9] : memref<1x1xf32, #tpu.memory_space<smem>>
      memref.store %18, %arg4[%c0_8, %c0_9] : memref<1x1xf32, #tpu.memory_space<smem>>
    } else {
    }
    return
  }
  func.func @transform_0(%arg0: i32, %arg1: i32) -> (i32, i32) {
    %c1_i32 = arith.constant 1 : i32
    %0 = arith.muli %arg0, %c1_i32 : i32
    %1 = arith.addi %0, %arg1 : i32
    %c0_i32 = arith.constant 0 : i32
    %2 = arith.minsi %1, %c0_i32 : i32
    %c0_i32_0 = arith.constant 0 : i32
    %c0_i32_1 = arith.constant 0 : i32
    return %2, %c0_i32_0 : i32, i32
  }
  func.func @transform_1(%arg0: i32, %arg1: i32) -> (i32, i32) {
    %c1_i32 = arith.constant 1 : i32
    %0 = arith.muli %arg0, %c1_i32 : i32
    %1 = arith.addi %0, %arg1 : i32
    %c0_i32 = arith.constant 0 : i32
    %2 = arith.minsi %1, %c0_i32 : i32
    %c0_i32_0 = arith.constant 0 : i32
    %c0_i32_1 = arith.constant 0 : i32
    return %2, %c0_i32_0 : i32, i32
  }
  func.func @transform_2(%arg0: i32, %arg1: i32) -> (i32, i32) {
    %c0_i32 = arith.constant 0 : i32
    %c0_i32_0 = arith.constant 0 : i32
    return %arg0, %c0_i32 : i32, i32
  }
}

</mosaic_0001>

<llo_original>
// kernel: tpu_custom_call.1
$region0: #{tpu_custom_call.1}
  #allocation0 [shape = 'u32[]', space=smem, size = 0x4, offset = 0x4, fixed_abs, tag = 'smem constant byte address 0x4 - core index']
  #allocation1 [shape = 'u32[144,128]{1,0:T(1,128)}', space=vmem, size = 0x12000, scoped, tag = 'internal scratch']
  #allocation2 [shape = 'f32[8,128]{1,0:T(8,128)}', space=vmem, size = 0x1000, scoped, tag = 'scratch operand']
  %s0 = inlined_call_operand.hbm [shape: f32[16,128], index: 0, kind: input, shape index: {}]
  %s1 = inlined_call_operand.hbm [shape: f32[16,128], index: 1, kind: input, shape index: {}]
  %s2 = inlined_call_operand.hbm [shape: f32[1,1], index: 2, kind: output, shape index: {}]
  %s3 = sld [smem:[#allocation0]]
  $region42: #{tpu_custom_call.1} parent=0
    _
  %s5 = ssub.s32 1, %s3
  %s6 = scalar_select 0, %s5, %s3
  $region1: #{tpu_custom_call.1} parent=0
    #allocation3 [shape = 'u8[16384]{0}', space=vmem, size = 0x4000, scoped, tag = 'input window, operand 0, single buffered']
    #allocation4 [shape = 's32[1]{0}', space=sflag, size = 0x4, scoped, tag = 'scoped memory for tpu_custom_call.1']
    #allocation5 [shape = 's32[1]{0}', space=sflag, size = 0x4, scoped, tag = 'scoped memory for tpu_custom_call.1']
    #allocation6 [shape = 'u8[16384]{0}', space=vmem, size = 0x4000, scoped, tag = 'input window, operand 1, single buffered']
    #allocation7 [shape = 's32[1]{0}', space=sflag, size = 0x4, scoped, tag = 'scoped memory for tpu_custom_call.1']
    #allocation8 [shape = 'u8[512]{0}', space=smem, size = 0x200, scoped, tag = 'output window, operand 0, single buffered']
    %7 = vsyncpa [#allocation4], 0
    %8 = vsyncpa [#allocation7], 0
    %9 = vsyncpa [#allocation5], 0
    // Predicated region
    $region2: #{tpu_custom_call.1} parent=1 // pred_check
      _
    $region3: #{tpu_custom_call.1} parent=1 // pred_check_branch
      %11 = sbr.rel (0) target = $region5
    $region4: #{tpu_custom_call.1} parent=1 // pred_region
      %s12 = sadd.s32 0, 0
      %p13 = scmp.lt.s32.totalorder %s12, 0
      %s14 = scalar_select %p13, %s12, 0
      %s15 = smul.u32 4, %s14
      %s16 = ssub.s32 2, %s15
      %s17 = smul.u32 128, %s16
      %s19 = ssub.s32 512, %s17
      %20 = vsyncadd [#allocation4], %s19
      %p21 = scmp.ne.s32.totalorder 0, %s17
      %s22 = smul.addr %s15, 128
      %s23 = scalar_lea.hbm %s0, %s22
      %s24 = smul.u32 8, %s16
      %s25 = sshll.u32 [#allocation3], 4
      %s26 = int_to_ptr.vmem [resolvable:$true] %s25
      %s27 = sshll.u32 %s24, 4
      %31 = dma.hbm_to_vmem [thread:$0]  (%p21), %s23, %s27, %s26, [#allocation4], 128, 128, 8
    $region5: #{tpu_custom_call.1} parent=1 // pred_fallthru
      _
    // Predicated region
    $region6: #{tpu_custom_call.1} parent=1 // pred_check
      _
    $region7: #{tpu_custom_call.1} parent=1 // pred_check_branch
      %33 = sbr.rel (0) target = $region9
    $region8: #{tpu_custom_call.1} parent=1 // pred_region
      %s34 = sadd.s32 0, 0
      %p35 = scmp.lt.s32.totalorder %s34, 0
      %s36 = scalar_select %p35, %s34, 0
      %s37 = smul.u32 4, %s36
      %s38 = ssub.s32 2, %s37
      %s39 = smul.u32 128, %s38
      %s41 = ssub.s32 512, %s39
      %42 = vsyncadd [#allocation7], %s41
      %p43 = scmp.ne.s32.totalorder 0, %s39
      %s44 = smul.addr %s37, 128
      %s45 = scalar_lea.hbm %s1, %s44
      %s46 = smul.u32 8, %s38
      %s47 = sshll.u32 [#allocation6], 4
      %s48 = int_to_ptr.vmem [resolvable:$true] %s47
      %s49 = sshll.u32 %s46, 4
      %53 = dma.hbm_to_vmem [thread:$0]  (%p43), %s45, %s49, %s48, [#allocation7], 128, 128, 8
    $region9: #{tpu_custom_call.1} parent=1 // pred_fallthru
      _
    // Predicated region
    $region10: #{tpu_custom_call.1} parent=1 // pred_check
      _
    $region11: #{tpu_custom_call.1} parent=1 // pred_check_branch
      %55 = sbr.rel (0) target = $region13
    $region12: #{tpu_custom_call.1} parent=1 // pred_region
      %56 = dma.done [#allocation4], 512
    $region13: #{tpu_custom_call.1} parent=1 // pred_fallthru
      _
    // Predicated region
    $region14: #{tpu_custom_call.1} parent=1 // pred_check
      _
    $region15: #{tpu_custom_call.1} parent=1 // pred_check_branch
      %58 = sbr.rel (0) target = $region17
    $region16: #{tpu_custom_call.1} parent=1 // pred_region
      %59 = dma.done [#allocation7], 512
    $region17: #{tpu_custom_call.1} parent=1 // pred_fallthru
      _
    %s60 = sadd.s32 0, 0
    %p61 = scmp.lt.s32.totalorder %s60, 0
    %s62 = scalar_select %p61, %s60, 0
    %s63 = smul.u32 4, %s62
    %s64 = ssub.s32 2, %s63
    %s65 = smul.u32 128, %s64
    %s66 = sadd.s32 0, 0
    %p67 = scmp.lt.s32.totalorder %s66, 0
    %s68 = scalar_select %p67, %s66, 0
    %s69 = smul.u32 4, %s68
    %s70 = ssub.s32 2, %s69
    %s71 = smul.u32 128, %s70
    %s72 = sadd.s32 0, 0
    %p73 = scmp.eq.s32.totalorder 0, 0
    // Predicated region
    $region18: #{tpu_custom_call.1} parent=1 // pred_check
      %p74 = pneg %p73
    $region19: #{tpu_custom_call.1} parent=1 // pred_check_branch
      %76 = sbr.rel (%p74) target = $region21
    $region20: #{tpu_custom_call.1} parent=1 // pred_region
      %77 = vst [vmem:[#allocation2] sm:$0xff] 0.0
    $region21: #{tpu_custom_call.1} parent=1 // pred_fallthru
      _
    %p78 = scmp.lt.s32.totalorder %s72, 0
    // Predicated region
    $region22: #{tpu_custom_call.1} parent=1 // pred_check
      %p79 = pneg %p78
    $region23: #{tpu_custom_call.1} parent=1 // pred_check_branch
      %81 = sbr.rel (%p79) target = $region25
    $region24: #{tpu_custom_call.1} parent=1 // pred_region
      %v82 = vld [vmem:[#allocation2] sm:$0xff]
      %v83 = vld [vmem:[#allocation3] sm:$0xff]
      %v84 = vld [vmem:[#allocation3 + $0x8] sm:$0xff]
      %v85 = vld [vmem:[#allocation3 + $0x10] sm:$0xff]
      %v86 = vld [vmem:[#allocation3 + $0x18] sm:$0xff]
      %v87 = vld [vmem:[#allocation6] sm:$0xff]
      %v88 = vld [vmem:[#allocation6 + $0x8] sm:$0xff]
      %v89 = vld [vmem:[#allocation6 + $0x10] sm:$0xff]
      %v90 = vld [vmem:[#allocation6 + $0x18] sm:$0xff]
      %v91 = vsub.f32 %v83, %v87
      %v92 = vsub.f32 %v84, %v88
      %v93 = vsub.f32 %v85, %v89
      %v94 = vsub.f32 %v86, %v90
      %v95 = vmul.f32 %v91, %v91
      %v96 = vmul.f32 %v92, %v92
      %v97 = vmul.f32 %v93, %v93
      %v98 = vmul.f32 %v94, %v94
      %v99 = vadd.f32 %v95, %v96
      %v100 = vadd.f32 %v99, %v97
      %v101 = vadd.f32 %v100, %v98
      %v102 = vadd.f32 %v82, %v101
      %103 = vst [vmem:[#allocation2] sm:$0xff] %v102
    $region25: #{tpu_custom_call.1} parent=1 // pred_fallthru
      _
    %p104 = scmp.eq.s32.totalorder %s72, 0
    // Predicated region
    $region26: #{tpu_custom_call.1} parent=1 // pred_check
      %p105 = pneg %p104
    $region27: #{tpu_custom_call.1} parent=1 // pred_check_branch
      %107 = sbr.rel (%p105) target = $region29
    $region28: #{tpu_custom_call.1} parent=1 // pred_region
      %v108 = vld [vmem:[#allocation2] sm:$0xff]
      %v109 = vld [vmem:[#allocation3] sm:$0xff]
      %v110 = vld [vmem:[#allocation3 + $0x8] sm:$0xff]
      %v111 = vld [vmem:[#allocation3 + $0x10] sm:$0xff]
      %v112 = vld [vmem:[#allocation3 + $0x18] sm:$0xff]
      %v113 = vld [vmem:[#allocation6] sm:$0xff]
      %v114 = vld [vmem:[#allocation6 + $0x8] sm:$0xff]
      %v115 = vld [vmem:[#allocation6 + $0x10] sm:$0xff]
      %v116 = vld [vmem:[#allocation6 + $0x18] sm:$0xff]
      %v117 = vsub.f32 %v109, %v113
      %v118 = vsub.f32 %v110, %v114
      %v119 = vsub.f32 %v111, %v115
      %v120 = vsub.f32 %v112, %v116
      %v121 = vlaneseq
      %v122 = vshrl.u32 %v121, 7
      %v123 = vadd.s32 %v122, 8
      %v124 = vadd.s32 %v122, 16
      %v125 = vadd.s32 %v122, 24
      %v126 = vlaneseq
      %v127 = vand.u32 %v126, 127
      %v128 = vmul.u32 %v122, 128
      %v129 = vmul.u32 %v123, 128
      %v130 = vmul.u32 %v124, 128
      %v131 = vmul.u32 %v125, 128
      %v132 = vadd.s32 %v128, %v127
      %v133 = vadd.s32 %v129, %v127
      %v134 = vadd.s32 %v130, %v127
      %v135 = vadd.s32 %v131, %v127
      %vm136 = vcmp.lt.s32.totalorder %v132, 2048
      %vm137 = vcmp.lt.s32.totalorder %v133, 2048
      %vm138 = vcmp.lt.s32.totalorder %v134, 2048
      %vm139 = vcmp.lt.s32.totalorder %v135, 2048
      %v140 = vsel %vm136, %v117, 0.0
      %v141 = vsel %vm137, %v118, 0.0
      %v142 = vsel %vm138, %v119, 0.0
      %v143 = vsel %vm139, %v120, 0.0
      %v144 = vmul.f32 %v140, %v140
      %v145 = vmul.f32 %v141, %v141
      %v146 = vmul.f32 %v142, %v142
      %v147 = vmul.f32 %v143, %v143
      %v148 = vadd.f32 %v144, %v145
      %v149 = vadd.f32 %v148, %v146
      %v150 = vadd.f32 %v149, %v147
      %v151 = vadd.f32 %v108, %v150
      %152 = vst [vmem:[#allocation2] sm:$0xff] %v151
    $region29: #{tpu_custom_call.1} parent=1 // pred_fallthru
      _
    // Predicated region
    $region30: #{tpu_custom_call.1} parent=1 // pred_check
      %p153 = pneg %p73
    $region31: #{tpu_custom_call.1} parent=1 // pred_check_branch
      %155 = sbr.rel (%p153) target = $region33
    $region32: #{tpu_custom_call.1} parent=1 // pred_region
      %v156 = vld [vmem:[#allocation2] sm:$0xff]
      %157 = vadd.xlane.f32.xlu0 %v156
      %v158 = vpop.xlane.xlu0 %157
      %v159 = vrot.slane %v158, 4
      %v160 = vadd.f32 %v158, %v159
      %v161 = vrot.slane %v160, 2
      %v162 = vadd.f32 %v160, %v161
      %v163 = vrot.slane %v162, 1
      %v164 = vadd.f32 %v162, %v163
      %s165 = vtos %v164
      %s166 = scalar_lea.smem [#allocation8], 0
      %167 = sst [smem:[%s166]] %s165
    $region33: #{tpu_custom_call.1} parent=1 // pred_fallthru
      _
    // Predicated region
    $region34: #{tpu_custom_call.1} parent=1 // pred_check
      _
    $region35: #{tpu_custom_call.1} parent=1 // pred_check_branch
      %169 = sbr.rel (0) target = $region37
    $region36: #{tpu_custom_call.1} parent=1 // pred_region
      %s171 = ssub.s32 16, 16
      %172 = vsyncadd [#allocation5], %s171
      %175 = dma.smem_to_hbm [#allocation8], 16, %s2, [#allocation5]
    $region37: #{tpu_custom_call.1} parent=1 // pred_fallthru
      _
    // Predicated region
    $region38: #{tpu_custom_call.1} parent=1 // pred_check
      _
    $region39: #{tpu_custom_call.1} parent=1 // pred_check_branch
      %177 = sbr.rel (0) target = $region41
    $region40: #{tpu_custom_call.1} parent=1 // pred_region
      %178 = dma.done [#allocation5], 16
    $region41: #{tpu_custom_call.1} parent=1 // pred_fallthru
      _
    %179 = sfence
    %180 = vsyncpa [#allocation4], 1
    %181 = vsyncpa [#allocation7], 1
    %182 = vsyncpa [#allocation5], 1

</llo_original>
